<compile_context>
chip_gen: v6e
topology: v6e:2x2x1
jax: 0.10.0
libtpu: 0.0.40
codegen_flags: <defaults>
</compile_context>

<pallas_src>
import jax
import jax.numpy as jnp
from jax.experimental import pallas as pl
from jax.experimental.pallas import tpu as pltpu


def _round_up(x, m):
    return ((x + m - 1) // m) * m


def _vmem_tile_bytes(rows, cols, dtype):
    """Physical VMEM footprint of one [rows, cols] tile (sublane/lane padded)."""
    isz = jnp.dtype(dtype).itemsize
    sublane = {4: 8, 2: 16, 1: 32}.get(isz, 8)
    return _round_up(max(rows, 1), sublane) * _round_up(max(cols, 1), 128) * isz


def _choose_batch_tile(B, block_b):
    """Batch tile: multiple of 8 sublanes, <= block_b rows, balanced across the
    grid, and (when B allows) >= 2 tiles so a v7x megacore can split the
    'parallel' batch axis. Harmless no-op on v5e/v6e (one TensorCore)."""
    block_b = _round_up(max(block_b, 8), 8)
    if B <= 8:
        return 8
    n_tiles = max(2, pl.cdiv(B, block_b))
    tb = _round_up(pl.cdiv(B, n_tiles), 8)
    return min(tb, _round_up(B, 8), block_b)


def mlp_kernel(x_ref, w1_ref, b1_ref, w2_ref, b2_ref, o_ref):
    x = x_ref[...]                                              # [TB, D]
    # Layer 1: Linear + bias + ReLU. MXU matmul with f32 accumulation; the
    # elementwise ops stay on the f32 accumulator (correct & fast on v5e too).
    h = jnp.dot(x, w1_ref[...], preferred_element_type=jnp.float32)
    h = h + b1_ref[...].astype(jnp.float32)
    h = jnp.maximum(h, 0.0)
    # Dropout(0.3): identity in eval mode.
    # Layer 2: Linear + bias.
    out = jnp.dot(h.astype(w2_ref.dtype), w2_ref[...],
                  preferred_element_type=jnp.float32)
    out = out + b2_ref[...].astype(jnp.float32)
    o_ref[...] = out.astype(o_ref.dtype)                        # [TB, O]


def simple_mlp_forward(x, w1, b1, w2, b2, *, block_b=2048):
    """x: [B, D], w1: [D, H], b1: [1, H], w2: [H, O], b2: [1, O] -> [B, O].

    Weights are [in, out] (transposed vs. the PyTorch state_dict). Mixed
    precision is supported: bf16 x / w1 / w2 halve HBM streaming while
    accumulation and bias/ReLU remain f32 inside the kernel.
    """
    B, D = x.shape
    H = w1.shape[1]
    O = w2.shape[1]
    out_dtype = x.dtype

    TB = _choose_batch_tile(B, block_b)
    num_tiles = pl.cdiv(B, TB)

    # VMEM budget: physically-padded tiles, double-buffer accounting for every
    # operand (the constant-index weight/bias blocks stay resident, but budget
    # 2x to stay honest for larger generic shapes), plus compiler headroom.
    need = (2 * _vmem_tile_bytes(TB, D, x.dtype)
            + 2 * _vmem_tile_bytes(TB, O, out_dtype)
            + 2 * _vmem_tile_bytes(D, H, w1.dtype)
            + 2 * _vmem_tile_bytes(1, H, b1.dtype)
            + 2 * _vmem_tile_bytes(H, O, w2.dtype)
            + 2 * _vmem_tile_bytes(1, O, b2.dtype))
    try:
        vmem_cap = int(pltpu.get_tpu_info().vmem_capacity_bytes)
    except Exception:
        vmem_cap = 64 * 1024 * 1024          # v7x per-TC VMEM (smallest of v5e/v6e/v7x)
    vmem_limit = min(max(need + (4 << 20), 16 << 20), vmem_cap // 2)
    vmem_limit = max(vmem_limit, need)       # never request less than the tiles need

    def _isz(a):
        return jnp.dtype(a.dtype).itemsize

    cost = pl.CostEstimate(
        flops=2 * B * (D * H + H * O),
        transcendentals=0,
        bytes_accessed=(B * D * _isz(x) + B * O * jnp.dtype(out_dtype).itemsize
                        + D * H * _isz(w1) + H * _isz(b1)
                        + H * O * _isz(w2) + O * _isz(b2)),
    )

    return pl.pallas_call(
        mlp_kernel,
        out_shape=jax.ShapeDtypeStruct((B, O), out_dtype),
        grid_spec=pl.GridSpec(
            grid=(num_tiles,),
            in_specs=[
                pl.BlockSpec((TB, D), lambda i: (i, 0)),   # x: walks the batch (pipelined)
                pl.BlockSpec((D, H), lambda i: (0, 0)),    # w1: constant block -> VMEM-resident
                pl.BlockSpec((1, H), lambda i: (0, 0)),    # b1
                pl.BlockSpec((H, O), lambda i: (0, 0)),    # w2
                pl.BlockSpec((1, O), lambda i: (0, 0)),    # b2
            ],
            out_specs=pl.BlockSpec((TB, O), lambda i: (i, 0)),
        ),
        compiler_params=pltpu.CompilerParams(
            dimension_semantics=("parallel",),   # independent batch tiles -> megacore OK
            vmem_limit_bytes=int(vmem_limit),
        ),
        cost_estimate=cost,
    )(x, w1, b1, w2, b2)


if __name__ == "__main__":
    # Small shapes consistent with the module:
    #   input_size = 32, hidden = input_size // 2 = 16, output_size = 2, batch = 8
    B, D, O = 8, 32, 2
    H = D // 2

    key = jax.random.PRNGKey(0)
    kx, k1, k2, k3, k4 = jax.random.split(key, 5)

    x = jax.random.normal(kx, (B, D), dtype=jnp.float32)

    # Deterministic parameter init (kaiming-uniform-ish scale); stored as [in, out].
    bound1 = 1.0 / jnp.sqrt(D)
    w1 = jax.random.uniform(k1, (D, H), minval=-bound1, maxval=bound1, dtype=jnp.float32)
    b1 = jax.random.uniform(k2, (1, H), minval=-bound1, maxval=bound1, dtype=jnp.float32)
    bound2 = 1.0 / jnp.sqrt(H)
    w2 = jax.random.uniform(k3, (H, O), minval=-bound2, maxval=bound2, dtype=jnp.float32)
    b2 = jax.random.uniform(k4, (1, O), minval=-bound2, maxval=bound2, dtype=jnp.float32)

    def ref_forward(xa, w1a, b1a, w2a, b2a):
        xf = xa.astype(jnp.float32)
        h = jnp.maximum(xf @ w1a.astype(jnp.float32) + b1a.astype(jnp.float32), 0.0)
        h = h.astype(w2a.dtype).astype(jnp.float32)   # mimic kernel's pre-matmul cast
        return h @ w2a.astype(jnp.float32) + b2a.astype(jnp.float32)

    # f32, batch == one full tile.
    out = jax.block_until_ready(simple_mlp_forward(x, w1, b1, w2, b2))
    assert out.shape == (B, O)
    assert jnp.allclose(out, ref_forward(x, w1, b1, w2, b2), atol=1e-5, rtol=1e-5)

    # Ragged batch (not a multiple of the 8-row sublane tile): no wrapper-side
    # padding/slicing — Pallas masks the out-of-bounds rows of the last tile.
    B2 = 13
    x2 = jax.random.normal(jax.random.PRNGKey(7), (B2, D), dtype=jnp.float32)
    out2 = jax.block_until_ready(simple_mlp_forward(x2, w1, b1, w2, b2))
    assert out2.shape == (B2, O)
    assert jnp.allclose(out2, ref_forward(x2, w1, b1, w2, b2), atol=1e-5, rtol=1e-5)

    # Mixed precision: bf16 activations/weights stream half the HBM bytes;
    # accumulation and bias/ReLU stay in f32 inside the kernel.
    xb = x2.astype(jnp.bfloat16)
    w1b = w1.astype(jnp.bfloat16)
    w2b = w2.astype(jnp.bfloat16)
    out3 = jax.block_until_ready(simple_mlp_forward(xb, w1b, b1, w2b, b2))
    assert out3.shape == (B2, O)
    assert jnp.allclose(out3.astype(jnp.float32),
                        ref_forward(xb, w1b, b1, w2b, b2),
                        atol=5e-2, rtol=5e-2)

    print("KERNEL_OK")
</pallas_src>

<mosaic_0001>
module attributes {stable_mosaic.version = 11 : i64} {
  func.func @mlp_kernel(%arg0: i32, %arg1: memref<8x32xf32, #tpu.memory_space<vmem>>, %arg2: memref<32x16xf32, #tpu.memory_space<vmem>>, %arg3: memref<1x16xf32, #tpu.memory_space<vmem>>, %arg4: memref<16x2xf32, #tpu.memory_space<vmem>>, %arg5: memref<1x2xf32, #tpu.memory_space<vmem>>, %arg6: memref<8x2xf32, #tpu.memory_space<vmem>>) attributes {dimension_semantics = [#tpu.dimension_semantics<parallel>], iteration_bounds = array<i64: 1>, scalar_prefetch = 0 : i64, scratch_operands = 0 : i64, tpu.core_type = #tpu.core_type<tc>, window_params = [{transform_indices = @transform_0, window_bounds = array<i64: 8, 32>}, {pipeline_mode = #tpu.pipeline_mode<synchronous>, transform_indices = @transform_1, window_bounds = array<i64: 32, 16>}, {pipeline_mode = #tpu.pipeline_mode<synchronous>, transform_indices = @transform_2, window_bounds = array<i64: 1, 16>}, {pipeline_mode = #tpu.pipeline_mode<synchronous>, transform_indices = @transform_3, window_bounds = array<i64: 16, 2>}, {pipeline_mode = #tpu.pipeline_mode<synchronous>, transform_indices = @transform_4, window_bounds = array<i64: 1, 2>}, {transform_indices = @transform_5, window_bounds = array<i64: 8, 2>}]} {
    %c0 = arith.constant 0 : index
    %c0_0 = arith.constant 0 : index
    %0 = vector.load %arg1[%c0, %c0_0] : memref<8x32xf32, #tpu.memory_space<vmem>>, vector<8x32xf32>
    %c0_1 = arith.constant 0 : index
    %c0_2 = arith.constant 0 : index
    %1 = vector.load %arg2[%c0_1, %c0_2] : memref<32x16xf32, #tpu.memory_space<vmem>>, vector<32x16xf32>
    %cst = arith.constant dense<0.000000e+00> : vector<8x16xf32>
    %2 = tpu.matmul %0, %1, %cst {dimension_numbers = #tpu.dot_dimension_numbers<[1], [0], [0], [1], [0, 0, 1, 1], [], []>} : vector<8x32xf32>, vector<32x16xf32>, vector<8x16xf32> -> vector<8x16xf32>
    %c0_3 = arith.constant 0 : index
    %c0_4 = arith.constant 0 : index
    %3 = vector.load %arg3[%c0_3, %c0_4] : memref<1x16xf32, #tpu.memory_space<vmem>>, vector<1x16xf32>
    %4 = vector.broadcast %3 : vector<1x16xf32> to vector<8x16xf32>
    %5 = arith.addf %2, %4 : vector<8x16xf32>
    %cst_5 = arith.constant 0.000000e+00 : f32
    %6 = vector.broadcast %cst_5 : f32 to vector<8x16xf32>
    %7 = arith.maximumf %5, %6 : vector<8x16xf32>
    %c0_6 = arith.constant 0 : index
    %c0_7 = arith.constant 0 : index
    %8 = vector.load %arg4[%c0_6, %c0_7] : memref<16x2xf32, #tpu.memory_space<vmem>>, vector<16x2xf32>
    %cst_8 = arith.constant dense<0.000000e+00> : vector<8x2xf32>
    %9 = tpu.matmul %7, %8, %cst_8 {dimension_numbers = #tpu.dot_dimension_numbers<[1], [0], [0], [1], [0, 0, 1, 1], [], []>} : vector<8x16xf32>, vector<16x2xf32>, vector<8x2xf32> -> vector<8x2xf32>
    %c0_9 = arith.constant 0 : index
    %c0_10 = arith.constant 0 : index
    %10 = vector.load %arg5[%c0_9, %c0_10] : memref<1x2xf32, #tpu.memory_space<vmem>>, vector<1x2xf32>
    %11 = vector.broadcast %10 : vector<1x2xf32> to vector<8x2xf32>
    %12 = arith.addf %9, %11 : vector<8x2xf32>
    %c0_11 = arith.constant 0 : index
    %c0_12 = arith.constant 0 : index
    %13 = vector.load %arg6[%c0_11, %c0_12] : memref<8x2xf32, #tpu.memory_space<vmem>>, vector<8x2xf32>
    tpu.vector_store %arg6[%c0_11, %c0_12], %12 {strides = array<i32>} : memref<8x2xf32, #tpu.memory_space<vmem>>, vector<8x2xf32>,
    return
  }
  func.func @transform_0(%arg0: i32) -> (i32, i32) {
    %c0_i32 = arith.constant 0 : i32
    %c0_i32_0 = arith.constant 0 : i32
    return %arg0, %c0_i32 : i32, i32
  }
  func.func @transform_1(%arg0: i32) -> (i32, i32) {
    %c0_i32 = arith.constant 0 : i32
    %c0_i32_0 = arith.constant 0 : i32
    %c0_i32_1 = arith.constant 0 : i32
    return %c0_i32, %c0_i32_0 : i32, i32
  }
  func.func @transform_2(%arg0: i32) -> (i32, i32) {
    %c0_i32 = arith.constant 0 : i32
    %c0_i32_0 = arith.constant 0 : i32
    %c0_i32_1 = arith.constant 0 : i32
    return %c0_i32, %c0_i32_0 : i32, i32
  }
  func.func @transform_3(%arg0: i32) -> (i32, i32) {
    %c0_i32 = arith.constant 0 : i32
    %c0_i32_0 = arith.constant 0 : i32
    %c0_i32_1 = arith.constant 0 : i32
    return %c0_i32, %c0_i32_0 : i32, i32
  }
  func.func @transform_4(%arg0: i32) -> (i32, i32) {
    %c0_i32 = arith.constant 0 : i32
    %c0_i32_0 = arith.constant 0 : i32
    %c0_i32_1 = arith.constant 0 : i32
    return %c0_i32, %c0_i32_0 : i32, i32
  }
  func.func @transform_5(%arg0: i32) -> (i32, i32) {
    %c0_i32 = arith.constant 0 : i32
    %c0_i32_0 = arith.constant 0 : i32
    return %arg0, %c0_i32 : i32, i32
  }
}

</mosaic_0001>

<llo_original>
// kernel: tpu_custom_call.1
$region0: #{tpu_custom_call.1}
  #allocation0 [shape = 'u32[]', space=smem, size = 0x4, offset = 0x4, fixed_abs, tag = 'smem constant byte address 0x4 - core index']
  #allocation1 [shape = 'u32[144,128]{1,0:T(1,128)}', space=vmem, size = 0x12000, scoped, tag = 'internal scratch']
  %s0 = inlined_call_operand.vmem [shape: f32[8,32], index: 0, kind: input, shape index: {}]
  %s1 = inlined_call_operand.vmem [shape: f32[32,16], index: 1, kind: input, shape index: {}]
  %s2 = inlined_call_operand.vmem [shape: f32[1,16], index: 2, kind: input, shape index: {}]
  %s3 = inlined_call_operand.vmem [shape: f32[16,2], index: 3, kind: input, shape index: {}]
  %s4 = inlined_call_operand.vmem [shape: f32[1,2], index: 4, kind: input, shape index: {}]
  %s5 = inlined_call_operand.vmem [shape: f32[8,2], index: 5, kind: output, shape index: {}]
  %s6 = sld [smem:[#allocation0]]
  $region30: #{tpu_custom_call.1} parent=0
    _
  %s8 = ssub.s32 1, %s6
  %s9 = scalar_select 0, %s8, %s6
  // Predicated region
  $region2: #{tpu_custom_call.1} parent=0 // pred_check
    _
  $region3: #{tpu_custom_call.1} parent=0 // pred_check_branch
    %11 = sbr.rel (0) target = $region5
  $region4: #{tpu_custom_call.1} parent=0 // pred_region
    _
  $region5: #{tpu_custom_call.1} parent=0 // pred_fallthru
    _
  // Predicated region
  $region6: #{tpu_custom_call.1} parent=0 // pred_check
    _
  $region7: #{tpu_custom_call.1} parent=0 // pred_check_branch
    %13 = sbr.rel (0) target = $region9
  $region8: #{tpu_custom_call.1} parent=0 // pred_region
    _
  $region9: #{tpu_custom_call.1} parent=0 // pred_fallthru
    _
  // Predicated region
  $region10: #{tpu_custom_call.1} parent=0 // pred_check
    _
  $region11: #{tpu_custom_call.1} parent=0 // pred_check_branch
    %15 = sbr.rel (0) target = $region13
  $region12: #{tpu_custom_call.1} parent=0 // pred_region
    _
  $region13: #{tpu_custom_call.1} parent=0 // pred_fallthru
    _
  // Predicated region
  $region14: #{tpu_custom_call.1} parent=0 // pred_check
    _
  $region15: #{tpu_custom_call.1} parent=0 // pred_check_branch
    %17 = sbr.rel (0) target = $region17
  $region16: #{tpu_custom_call.1} parent=0 // pred_region
    _
  $region17: #{tpu_custom_call.1} parent=0 // pred_fallthru
    _
  // Predicated region
  $region18: #{tpu_custom_call.1} parent=0 // pred_check
    _
  $region19: #{tpu_custom_call.1} parent=0 // pred_check_branch
    %19 = sbr.rel (0) target = $region21
  $region20: #{tpu_custom_call.1} parent=0 // pred_region
    _
  $region21: #{tpu_custom_call.1} parent=0 // pred_fallthru
    _
  %v20 = vld [vmem:[%s0] sm:$0xff]
  %v21 = vld [vmem:[%s1] sm:$0xff]
  %v22 = vld [vmem:[%s1 + $0x8] sm:$0xff]
  %v23 = vld [vmem:[%s1 + $0x10] sm:$0xff]
  %v24 = vld [vmem:[%s1 + $0x18] sm:$0xff]
  %v25 = vld [vmem:[%s2] sm:$0x1]
  %v27 = vlaneseq
  %v28 = vshrl.u32 %v27, 7
  %v29 = vsub.s32 0, %v28
  %v30 = vrot.slane %v25, %v29
  %vm32 = vcmask 261120
  %v34 = vsel %vm32, %v20, 0
  %36 = vmatprep.subr.mxu0 0.0
  %37 = vmatpush1.msra.mxu0 0.0
  %38 = vmatprep.subr.mxu0 0.0
  %39 = vmatpush1.msra.mxu0 0.0
  %40 = vmatprep.subr.mxu0 0.0
  %41 = vmatpush1.msra.mxu0 0.0
  %42 = vmatprep.subr.mxu0 0.0
  %43 = vmatpush1.msra.mxu0 0.0
  %44 = vmatprep.subr.mxu0 0.0
  %45 = vmatpush1.msra.mxu0 0.0
  %46 = vmatprep.subr.mxu0 0.0
  %47 = vmatpush1.msra.mxu0 0.0
  %48 = vmatprep.subr.mxu0 0.0
  %49 = vmatpush1.msra.mxu0 0.0
  %50 = vmatprep.subr.mxu0 0.0
  %51 = vmatpush1.msra.mxu0 0.0
  %52 = vmatprep.subr.mxu0 0.0
  %53 = vmatpush1.msra.mxu0 0.0
  %54 = vmatprep.subr.mxu0 0.0
  %55 = vmatpush1.msra.mxu0 0.0
  %56 = vmatprep.subr.mxu0 0.0
  %57 = vmatpush1.msra.mxu0 0.0
  %58 = vmatprep.subr.mxu0 0.0
  %59 = vmatpush1.msra.mxu0 0.0
  %60 = vmatprep.subr.mxu0 0.0
  %61 = vmatpush1.msra.mxu0 %v24
  %62 = vmatprep.subr.mxu0 0.0
  %63 = vmatpush1.msra.mxu0 %v23
  %64 = vmatprep.subr.mxu0 0.0
  %65 = vmatpush1.msra.mxu0 %v22
  %66 = vmatprep.subr.mxu0 0.0
  %67 = vmatpush1.msra.mxu0 %v21
  %68 = vmatprep.subr.mxu0 0.0
  %69 = vmatpush2.msra.mxu0 0.0
  %70 = vmatprep.subr.mxu0 0.0
  %71 = vmatpush2.msra.mxu0 0.0
  %72 = vmatprep.subr.mxu0 0.0
  %73 = vmatpush2.msra.mxu0 0.0
  %74 = vmatprep.subr.mxu0 0.0
  %75 = vmatpush2.msra.mxu0 0.0
  %76 = vmatprep.subr.mxu0 0.0
  %77 = vmatpush2.msra.mxu0 0.0
  %78 = vmatprep.subr.mxu0 0.0
  %79 = vmatpush2.msra.mxu0 0.0
  %80 = vmatprep.subr.mxu0 0.0
  %81 = vmatpush2.msra.mxu0 0.0
  %82 = vmatprep.subr.mxu0 0.0
  %83 = vmatpush2.msra.mxu0 0.0
  %84 = vmatprep.subr.mxu0 0.0
  %85 = vmatpush2.msra.mxu0 0.0
  %86 = vmatprep.subr.mxu0 0.0
  %87 = vmatpush2.msra.mxu0 0.0
  %88 = vmatprep.subr.mxu0 0.0
  %89 = vmatpush2.msra.mxu0 0.0
  %90 = vmatprep.subr.mxu0 0.0
  %91 = vmatpush2.msra.mxu0 0.0
  %92 = vmatprep.subr.mxu0 0.0
  %93 = vmatpush2.msra.mxu0 0.0
  %94 = vmatprep.subr.mxu0 0.0
  %95 = vmatpush2.msra.mxu0 0.0
  %96 = vmatprep.subr.mxu0 0.0
  %97 = vmatpush2.msra.mxu0 0.0
  %98 = vmatprep.subr.mxu0 0.0
  %99 = vmatpush2.msra.mxu0 0.0
  %100 = vmatprep.mubr.f32.mxu0 0.0
  %101 = vmatmul.mubr.f32.gmra.mxu0 %v34
  %v102 = vpop.f32.mrf.mxu0
  %v103 = vadd.f32 %v30, %v102
  %v104 = vpop.f32.mrf.mxu0
  %105 = vdwg.mxu0
  %v106 = vmax.f32 %v103, 0.0
  %v107 = vld [vmem:[%s3] sm:$0xff]
  %v108 = vld [vmem:[%s3 + $0x8] sm:$0xff]
  %v109 = vld [vmem:[%s4] sm:$0x1]
  %v111 = vlaneseq
  %v112 = vshrl.u32 %v111, 7
  %v113 = vsub.s32 0, %v112
  %v114 = vrot.slane %v109, %v113
  %vm116 = vcmask 130048
  %v118 = vsel %vm116, %v106, 0
  %120 = vmatprep.subr.mxu0 0.0
  %121 = vmatpush1.msra.mxu0 0.0
  %122 = vmatprep.subr.mxu0 0.0
  %123 = vmatpush1.msra.mxu0 0.0
  %124 = vmatprep.subr.mxu0 0.0
  %125 = vmatpush1.msra.mxu0 0.0
  %126 = vmatprep.subr.mxu0 0.0
  %127 = vmatpush1.msra.mxu0 0.0
  %128 = vmatprep.subr.mxu0 0.0
  %129 = vmatpush1.msra.mxu0 0.0
  %130 = vmatprep.subr.mxu0 0.0
  %131 = vmatpush1.msra.mxu0 0.0
  %132 = vmatprep.subr.mxu0 0.0
  %133 = vmatpush1.msra.mxu0 0.0
  %134 = vmatprep.subr.mxu0 0.0
  %135 = vmatpush1.msra.mxu0 0.0
  %136 = vmatprep.subr.mxu0 0.0
  %137 = vmatpush1.msra.mxu0 0.0
  %138 = vmatprep.subr.mxu0 0.0
  %139 = vmatpush1.msra.mxu0 0.0
  %140 = vmatprep.subr.mxu0 0.0
  %141 = vmatpush1.msra.mxu0 0.0
  %142 = vmatprep.subr.mxu0 0.0
  %143 = vmatpush1.msra.mxu0 0.0
  %144 = vmatprep.subr.mxu0 0.0
  %145 = vmatpush1.msra.mxu0 0.0
  %146 = vmatprep.subr.mxu0 0.0
  %147 = vmatpush1.msra.mxu0 0.0
  %148 = vmatprep.subr.mxu0 0.0
  %149 = vmatpush1.msra.mxu0 %v108
  %150 = vmatprep.subr.mxu0 0.0
  %151 = vmatpush1.msra.mxu0 %v107
  %152 = vmatprep.subr.mxu0 0.0
  %153 = vmatpush2.msra.mxu0 0.0
  %154 = vmatprep.subr.mxu0 0.0
  %155 = vmatpush2.msra.mxu0 0.0
  %156 = vmatprep.subr.mxu0 0.0
  %157 = vmatpush2.msra.mxu0 0.0
  %158 = vmatprep.subr.mxu0 0.0
  %159 = vmatpush2.msra.mxu0 0.0
  %160 = vmatprep.subr.mxu0 0.0
  %161 = vmatpush2.msra.mxu0 0.0
  %162 = vmatprep.subr.mxu0 0.0
  %163 = vmatpush2.msra.mxu0 0.0
  %164 = vmatprep.subr.mxu0 0.0
  %165 = vmatpush2.msra.mxu0 0.0
  %166 = vmatprep.subr.mxu0 0.0
  %167 = vmatpush2.msra.mxu0 0.0
  %168 = vmatprep.subr.mxu0 0.0
  %169 = vmatpush2.msra.mxu0 0.0
  %170 = vmatprep.subr.mxu0 0.0
  %171 = vmatpush2.msra.mxu0 0.0
  %172 = vmatprep.subr.mxu0 0.0
  %173 = vmatpush2.msra.mxu0 0.0
  %174 = vmatprep.subr.mxu0 0.0
  %175 = vmatpush2.msra.mxu0 0.0
  %176 = vmatprep.subr.mxu0 0.0
  %177 = vmatpush2.msra.mxu0 0.0
  %178 = vmatprep.subr.mxu0 0.0
  %179 = vmatpush2.msra.mxu0 0.0
  %180 = vmatprep.subr.mxu0 0.0
  %181 = vmatpush2.msra.mxu0 0.0
  %182 = vmatprep.subr.mxu0 0.0
  %183 = vmatpush2.msra.mxu0 0.0
  %184 = vmatprep.mubr.f32.mxu0 0.0
  %185 = vmatmul.mubr.f32.gmra.mxu0 %v118
  %v186 = vpop.f32.mrf.mxu0
  %v187 = vadd.f32 %v114, %v186
  %v188 = vpop.f32.mrf.mxu0
  %189 = vdwg.mxu0
  %vm190 = vcmask 15360
  %191 = vst.msk [vmem:[%s5] sm:$0xff] %vm190, %v187
  // Predicated region
  $region22: #{tpu_custom_call.1} parent=0 // pred_check
    _
  $region23: #{tpu_custom_call.1} parent=0 // pred_check_branch
    %193 = sbr.rel (0) target = $region25
  $region24: #{tpu_custom_call.1} parent=0 // pred_region
    _
  $region25: #{tpu_custom_call.1} parent=0 // pred_fallthru
    _
  // Predicated region
  $region26: #{tpu_custom_call.1} parent=0 // pred_check
    _
  $region27: #{tpu_custom_call.1} parent=0 // pred_check_branch
    %195 = sbr.rel (0) target = $region29
  $region28: #{tpu_custom_call.1} parent=0 // pred_region
    _
  $region29: #{tpu_custom_call.1} parent=0 // pred_fallthru
    _

</llo_original>
